<compile_context>
chip_gen: v6e
topology: v6e:2x2x1
jax: 0.10.0
libtpu: 0.0.40
codegen_flags: <defaults>
</compile_context>

<pallas_src>
import math
import functools

import jax
import jax.numpy as jnp
import numpy as np
from jax import lax
from jax.experimental import pallas as pl
from jax.experimental.pallas import tpu as pltpu

EPS = 1e-5
NEG_BIG = -1e30   # finite "masked" score: avoids all -inf rows -> NaN


def _layer_norm(x, gamma, beta):
    # Centered two-pass LayerNorm on the resident (T, D) f32 tile.
    mu = jnp.mean(x, axis=-1, keepdims=True)
    xc = x - mu
    var = jnp.mean(xc * xc, axis=-1, keepdims=True)
    return xc * lax.rsqrt(var + EPS) * gamma + beta


# ---------------------------------------------------------------------------
# Prologue: LayerNorm K and V once and store them as bf16 in HBM; the main
# kernel then streams pre-normalized bf16 tiles (half the HBM bytes, no
# per-(q-tile, kv-tile) redundant LN work).
# ---------------------------------------------------------------------------
def prenorm_kv_kernel(k_ref, v_ref, lnp_ref, kn_ref, vn_ref):
    lnp = lnp_ref[...]                              # (8, D) packed LN params
    k = k_ref[0].astype(jnp.float32)                # (ts, D)
    v = v_ref[0].astype(jnp.float32)
    kn_ref[0] = _layer_norm(k, lnp[2:3], lnp[3:4]).astype(jnp.bfloat16)
    vn_ref[0] = _layer_norm(v, lnp[4:5], lnp[5:6]).astype(jnp.bfloat16)


def prenorm_kv(k, v, lnp, *, ts):
    B, S, D = k.shape
    blk = pl.BlockSpec((1, ts, D), lambda b, i: (b, i, 0))
    out = jax.ShapeDtypeStruct((B, S, D), jnp.bfloat16)
    return pl.pallas_call(
        prenorm_kv_kernel,
        out_shape=(out, out),
        grid=(B, S // ts),
        in_specs=[blk, blk, pl.BlockSpec(memory_space=pltpu.MemorySpace.VMEM)],
        out_specs=(blk, blk),
        compiler_params=pltpu.CompilerParams(
            dimension_semantics=("parallel", "parallel")),
    )(k, v, lnp)


# ---------------------------------------------------------------------------
# Main fused kernel: LN(q) cached once per q tile, online-softmax attention
# over pre-normalized bf16 K/V tiles, then residual + FFN suffix on the last
# kv step.
# ---------------------------------------------------------------------------
def transformer_block_kernel(
    q_ref, kn_ref, vn_ref,                         # streamed tiles
    lnp_ref, w1_ref, b1_ref, w2_ref, b2_ref,       # resident params (1 buffer)
    out_ref,
    qn_ref, m_ref, l_ref, acc_ref,                 # VMEM scratch
    *, scale, s_true, tk, mask_tail,
):
    ki = pl.program_id(2)
    nk = pl.num_programs(2)
    lnp = lnp_ref[...]                             # (8, D): gq,bq,gk,bk,gv,bv,gs,bs

    # --- per-(b, q-tile) init: cache LN(q) in bf16, reset online-softmax state
    @pl.when(ki == 0)
    def _init():
        q = q_ref[0].astype(jnp.float32)                      # (tq, D)
        qn_ref[...] = _layer_norm(q, lnp[0:1], lnp[1:2]).astype(jnp.bfloat16)
        m_ref[...] = jnp.full_like(m_ref, -jnp.inf)
        l_ref[...] = jnp.zeros_like(l_ref)
        acc_ref[...] = jnp.zeros_like(acc_ref)

    kn = kn_ref[0]                                            # (tk, D) bf16, pre-LN
    vn = vn_ref[0]

    # scores: contract last dims of both operands (no explicit transpose)
    s = lax.dot_general(
        qn_ref[...], kn,
        dimension_numbers=(((1,), (1,)), ((), ())),
        preferred_element_type=jnp.float32) * scale           # (tq, tk) f32

    if mask_tail:  # static: only compiled in when the sequence was padded
        col = ki * tk + lax.broadcasted_iota(jnp.int32, (1, tk), 1)
        s = jnp.where(col < s_true, s, NEG_BIG)

    # --- online softmax update
    m_prev = m_ref[...]
    m_new = jnp.maximum(m_prev, jnp.max(s, axis=-1, keepdims=True))
    alpha = jnp.exp(m_prev - m_new)
    p = jnp.exp(s - m_new)
    l_ref[...] = alpha * l_ref[...] + jnp.sum(p, axis=-1, keepdims=True)
    acc_ref[...] = alpha * acc_ref[...] + jnp.dot(
        p.astype(jnp.bfloat16), vn, preferred_element_type=jnp.float32)
    m_ref[...] = m_new

    # --- finalize: attention output, residual, and the FFN suffix
    @pl.when(ki == nk - 1)
    def _finalize():
        h = q_ref[0].astype(jnp.float32)                      # residual (pre-norm q)
        y = acc_ref[...] * pl.reciprocal(l_ref[...], approx=True) + h
        # suffix: Residual(LayerNorm -> Linear(D, 2D) -> ReLU -> Linear(2D, D))
        yn = _layer_norm(y, lnp[6:7], lnp[7:8]).astype(jnp.bfloat16)
        h1 = jnp.dot(yn, w1_ref[...],
                     preferred_element_type=jnp.float32) + b1_ref[...]
        h1 = jnp.maximum(h1, 0.0).astype(jnp.bfloat16)
        h2 = jnp.dot(h1, w2_ref[...],
                     preferred_element_type=jnp.float32) + b2_ref[...]
        out_ref[0] = (y + h2).astype(out_ref.dtype)


# ---------------------------------------------------------------------------
# Wrapper: generation-aware tiling + padding, bf16 param prep, pallas_call.
# ---------------------------------------------------------------------------
def _hw_defaults():
    """(tq_target, tk_target, vmem_limit_bytes) per TPU generation."""
    kind = ""
    try:
        kind = jax.devices()[0].device_kind.lower()
    except Exception:
        pass
    if "v5" in kind:
        # 128 MiB VMEM, 4x128x128 MXU: big q tile, 128-wide k tile (less f32
        # score-tile pressure on the 64-vreg file).
        return 512, 128, 96 * 1024 * 1024
    if "v6" in kind:
        # 128 MiB VMEM, 2x256x256 MXU: 256-multiples, big q tile.
        return 512, 256, 96 * 1024 * 1024
    if "v7" in kind:
        # 64 MiB VMEM per TensorCore: tighter budget.
        return 256, 256, 48 * 1024 * 1024
    return 256, 256, None   # unknown chip: leave compiler default


def _round_up(x, m):
    return (x + m - 1) // m * m


def _fit_tile(s_pad, target):
    """Largest multiple of 128 <= target that divides s_pad (s_pad if small)."""
    if s_pad <= target:
        return s_pad
    t = max(128, (target // 128) * 128)
    while t > 128:
        if s_pad % t == 0:
            return t
        t -= 128
    return 128


def transformer_block(q, k, v, params, *, tq=None, tk=None):
    B, S, D = q.shape
    H = 2 * D
    tq_def, tk_def, vmem_limit = _hw_defaults()

    # Pad the sequence to a 128-multiple when it needs tiling; short sequences
    # use a single full-extent block (allowed by the (8,128) rule), no padding.
    S_pad = _round_up(S, 128) if S > 128 else S
    if tq is None:
        tq = _fit_tile(S_pad, tq_def)
    if tk is None:
        tk = _fit_tile(S_pad, tk_def)
    assert S_pad % tq == 0 and S_pad % tk == 0, (S_pad, tq, tk)
    nq, nk = S_pad // tq, S_pad // tk
    scale = 1.0 / math.sqrt(D)
    mask_tail = S_pad != S

    if mask_tail:
        pad = ((0, 0), (0, S_pad - S), (0, 0))
        q = jnp.pad(q, pad)
        k = jnp.pad(k, pad)
        v = jnp.pad(v, pad)

    # Packed LayerNorm params: rows = [gq, bq, gk, bk, gv, bv, gs, bs] -> (8, D)
    lnp = jnp.concatenate(
        [params[n] for n in ("gq", "bq", "gk", "bk", "gv", "bv", "gs", "bs")],
        axis=0).astype(jnp.float32)

    # bf16 weights: halves DMA bytes / VMEM; f32 accumulation in the kernel.
    # TODO(synk): on v7x, fp8 weights + per-tensor scale would halve this again.
    w1 = params["w1"].astype(jnp.bfloat16)
    w2 = params["w2"].astype(jnp.bfloat16)

    # Prologue: LN(K), LN(V) computed once, stored bf16 in HBM.
    kn, vn = prenorm_kv(k, v, lnp, ts=tk)

    q_spec = pl.BlockSpec((1, tq, D), lambda b, qi, ki: (b, qi, 0))
    kv_spec = pl.BlockSpec((1, tk, D), lambda b, qi, ki: (b, ki, 0))
    # Constant-index operands: whole-array, single-buffered VMEM residents
    # (the Buffered(1) equivalent -- no wasted second buffer).
    resident = pl.BlockSpec(memory_space=pltpu.MemorySpace.VMEM)

    kernel = functools.partial(
        transformer_block_kernel,
        scale=scale, s_true=S, tk=tk, mask_tail=mask_tail)

    out = pl.pallas_call(
        kernel,
        out_shape=jax.ShapeDtypeStruct((B, S_pad, D), q.dtype),
        grid_spec=pltpu.PrefetchScalarGridSpec(
            num_scalar_prefetch=0,
            grid=(B, nq, nk),                 # kv reduction axis last
            in_specs=[q_spec, kv_spec, kv_spec,
                      resident, resident, resident, resident, resident],
            out_specs=q_spec,                 # resident across kv axis
            scratch_shapes=[
                pltpu.VMEM((tq, D), jnp.bfloat16),   # cached LN(q)
                pltpu.VMEM((tq, 1), jnp.float32),    # running max
                pltpu.VMEM((tq, 1), jnp.float32),    # running sum
                pltpu.VMEM((tq, D), jnp.float32),    # output accumulator
            ]),
        compiler_params=pltpu.CompilerParams(
            dimension_semantics=("parallel", "parallel", "arbitrary"),
            vmem_limit_bytes=vmem_limit),
    )(q, kn, vn, lnp, w1, params["b1"], w2, params["b2"])

    return out[:, :S, :] if mask_tail else out


# ---------------------------------------------------------------------------
# Pure-JAX reference and test harness.
# ---------------------------------------------------------------------------
def reference(q, k, v, params):
    def ln(x, g, b):
        mu = jnp.mean(x, axis=-1, keepdims=True)
        var = jnp.mean((x - mu) ** 2, axis=-1, keepdims=True)
        return (x - mu) / jnp.sqrt(var + EPS) * g + b

    h = q
    qn = ln(q, params["gq"], params["bq"])
    kn = ln(k, params["gk"], params["bk"])
    vn = ln(v, params["gv"], params["bv"])
    d = q.shape[-1]
    s = jnp.einsum("bqd,bkd->bqk", qn, kn) / math.sqrt(d)
    p = jax.nn.softmax(s, axis=-1)
    y = jnp.einsum("bqk,bkd->bqd", p, vn) + h
    yn = ln(y, params["gs"], params["bs"])
    h1 = jnp.maximum(yn @ params["w1"] + params["b1"], 0.0)
    h2 = h1 @ params["w2"] + params["b2"]
    return y + h2


def make_params(key, D):
    H = 2 * D
    ks = jax.random.split(key, 4)
    return {
        # LayerNorms initialize to gamma=1, beta=0 (PyTorch default)
        "gq": jnp.ones((1, D), jnp.float32), "bq": jnp.zeros((1, D), jnp.float32),
        "gk": jnp.ones((1, D), jnp.float32), "bk": jnp.zeros((1, D), jnp.float32),
        "gv": jnp.ones((1, D), jnp.float32), "bv": jnp.zeros((1, D), jnp.float32),
        "gs": jnp.ones((1, D), jnp.float32), "bs": jnp.zeros((1, D), jnp.float32),
        # Linear layers: small deterministic random weights
        "w1": jax.random.normal(ks[0], (D, H), jnp.float32) * 0.05,
        "b1": jax.random.normal(ks[1], (1, H), jnp.float32) * 0.05,
        "w2": jax.random.normal(ks[2], (H, D), jnp.float32) * 0.05,
        "b2": jax.random.normal(ks[3], (1, D), jnp.float32) * 0.05,
    }


if __name__ == "__main__":
    key = jax.random.PRNGKey(0)
    kq, kk, kv, kp = jax.random.split(key, 4)

    # bf16 MXU inputs + approx reciprocal -> compare at a looser tolerance.
    TOL = 3e-2

    # Case 1: tiny single-tile config (B=2, S=8, D=32).
    B, S, D = 2, 8, 32
    q = jax.random.normal(kq, (B, S, D), jnp.float32)
    k = jax.random.normal(kk, (B, S, D), jnp.float32)
    v = jax.random.normal(kv, (B, S, D), jnp.float32)
    params = make_params(kp, D)
    out = jax.block_until_ready(transformer_block(q, k, v, params))
    ref = reference(q, k, v, params)
    np.testing.assert_allclose(np.asarray(out), np.asarray(ref), rtol=TOL, atol=TOL)

    # Case 2: exercise the flash-style tiling path (multiple q and kv tiles).
    B2, S2, D2 = 2, 16, 32
    q2 = jax.random.normal(kq, (B2, S2, D2), jnp.float32)
    k2 = jax.random.normal(kk, (B2, S2, D2), jnp.float32)
    v2 = jax.random.normal(kv, (B2, S2, D2), jnp.float32)
    params2 = make_params(kp, D2)
    out2 = jax.block_until_ready(
        transformer_block(q2, k2, v2, params2, tq=8, tk=8))
    ref2 = reference(q2, k2, v2, params2)
    np.testing.assert_allclose(np.asarray(out2), np.asarray(ref2), rtol=TOL, atol=TOL)

    # Case 3: lane-aligned D and a non-128-multiple S -> exercises the padding
    # + key-mask path and the default (generation-aware) tile selection.
    B3, S3, D3 = 2, 200, 128
    q3 = jax.random.normal(kq, (B3, S3, D3), jnp.float32)
    k3 = jax.random.normal(kk, (B3, S3, D3), jnp.float32)
    v3 = jax.random.normal(kv, (B3, S3, D3), jnp.float32)
    params3 = make_params(kp, D3)
    out3 = jax.block_until_ready(transformer_block(q3, k3, v3, params3))
    ref3 = reference(q3, k3, v3, params3)
    np.testing.assert_allclose(np.asarray(out3), np.asarray(ref3), rtol=TOL, atol=TOL)

    print("KERNEL_OK")
</pallas_src>

<mosaic_0001>
module attributes {stable_mosaic.version = 11 : i64} {
  func.func @prenorm_kv_kernel(%arg0: i32, %arg1: i32, %arg2: memref<1x8x32xf32, #tpu.memory_space<vmem>>, %arg3: memref<1x8x32xf32, #tpu.memory_space<vmem>>, %arg4: memref<8x32xf32, #tpu.memory_space<vmem>>, %arg5: memref<1x8x32xbf16, #tpu.memory_space<vmem>>, %arg6: memref<1x8x32xbf16, #tpu.memory_space<vmem>>) attributes {dimension_semantics = [#tpu.dimension_semantics<parallel>, #tpu.dimension_semantics<parallel>], iteration_bounds = array<i64: 2, 1>, scalar_prefetch = 0 : i64, scratch_operands = 0 : i64, tpu.core_type = #tpu.core_type<tc>, window_params = [{transform_indices = @transform_0, window_bounds = array<i64: 1, 8, 32>}, {transform_indices = @transform_1, window_bounds = array<i64: 1, 8, 32>}, {pipeline_mode = #tpu.pipeline_mode<synchronous>, transform_indices = @transform_2, window_bounds = array<i64: 8, 32>}, {transform_indices = @transform_3, window_bounds = array<i64: 1, 8, 32>}, {transform_indices = @transform_4, window_bounds = array<i64: 1, 8, 32>}]} {
    %c0 = arith.constant 0 : index
    %c0_0 = arith.constant 0 : index
    %0 = vector.load %arg4[%c0, %c0_0] : memref<8x32xf32, #tpu.memory_space<vmem>>, vector<8x32xf32>
    %c0_1 = arith.constant 0 : index
    %c0_2 = arith.constant 0 : index
    %c0_3 = arith.constant 0 : index
    %1 = vector.load %arg2[%c0_1, %c0_2, %c0_3] : memref<1x8x32xf32, #tpu.memory_space<vmem>>, vector<1x8x32xf32>
    %2 = vector.shape_cast %1 : vector<1x8x32xf32> to vector<8x32xf32>
    %c0_4 = arith.constant 0 : index
    %c0_5 = arith.constant 0 : index
    %c0_6 = arith.constant 0 : index
    %3 = vector.load %arg3[%c0_4, %c0_5, %c0_6] : memref<1x8x32xf32, #tpu.memory_space<vmem>>, vector<1x8x32xf32>
    %4 = vector.shape_cast %3 : vector<1x8x32xf32> to vector<8x32xf32>
    %5 = vector.extract_strided_slice %0 {offsets = [2, 0], sizes = [1, 32], strides = [1, 1]} : vector<8x32xf32> to vector<1x32xf32>
    %6 = vector.extract_strided_slice %0 {offsets = [3, 0], sizes = [1, 32], strides = [1, 1]} : vector<8x32xf32> to vector<1x32xf32>
    %cst = arith.constant dense<0.000000e+00> : vector<8xf32>
    %7 = vector.multi_reduction <add>, %2, %cst [1] : vector<8x32xf32> to vector<8xf32>
    %8 = vector.shape_cast %7 : vector<8xf32> to vector<8x1xf32>
    %cst_7 = arith.constant 3.200000e+01 : f32
    %9 = vector.broadcast %cst_7 : f32 to vector<8x1xf32>
    %10 = arith.divf %8, %9 : vector<8x1xf32>
    %11 = vector.broadcast %10 : vector<8x1xf32> to vector<8x32xf32>
    %12 = arith.subf %2, %11 : vector<8x32xf32>
    %13 = arith.mulf %12, %12 : vector<8x32xf32>
    %cst_8 = arith.constant dense<0.000000e+00> : vector<8xf32>
    %14 = vector.multi_reduction <add>, %13, %cst_8 [1] : vector<8x32xf32> to vector<8xf32>
    %15 = vector.shape_cast %14 : vector<8xf32> to vector<8x1xf32>
    %cst_9 = arith.constant 3.200000e+01 : f32
    %16 = vector.broadcast %cst_9 : f32 to vector<8x1xf32>
    %17 = arith.divf %15, %16 : vector<8x1xf32>
    %cst_10 = arith.constant 9.99999974E-6 : f32
    %18 = vector.broadcast %cst_10 : f32 to vector<8x1xf32>
    %19 = arith.addf %17, %18 : vector<8x1xf32>
    %20 = math.rsqrt %19 : vector<8x1xf32>
    %21 = vector.broadcast %20 : vector<8x1xf32> to vector<8x32xf32>
    %22 = arith.mulf %12, %21 : vector<8x32xf32>
    %23 = vector.broadcast %5 : vector<1x32xf32> to vector<8x32xf32>
    %24 = arith.mulf %22, %23 : vector<8x32xf32>
    %25 = vector.broadcast %6 : vector<1x32xf32> to vector<8x32xf32>
    %26 = arith.addf %24, %25 : vector<8x32xf32>
    %27 = arith.truncf %26 : vector<8x32xf32> to vector<8x32xbf16>
    %c0_11 = arith.constant 0 : index
    %c0_12 = arith.constant 0 : index
    %c0_13 = arith.constant 0 : index
    %28 = vector.load %arg5[%c0_11, %c0_12, %c0_13] : memref<1x8x32xbf16, #tpu.memory_space<vmem>>, vector<1x8x32xbf16>
    %29 = vector.shape_cast %28 : vector<1x8x32xbf16> to vector<8x32xbf16>
    %30 = vector.shape_cast %27 : vector<8x32xbf16> to vector<1x8x32xbf16>
    tpu.vector_store %arg5[%c0_11, %c0_12, %c0_13], %30 {strides = array<i32>} : memref<1x8x32xbf16, #tpu.memory_space<vmem>>, vector<1x8x32xbf16>,
    %31 = vector.extract_strided_slice %0 {offsets = [4, 0], sizes = [1, 32], strides = [1, 1]} : vector<8x32xf32> to vector<1x32xf32>
    %32 = vector.extract_strided_slice %0 {offsets = [5, 0], sizes = [1, 32], strides = [1, 1]} : vector<8x32xf32> to vector<1x32xf32>
    %cst_14 = arith.constant dense<0.000000e+00> : vector<8xf32>
    %33 = vector.multi_reduction <add>, %4, %cst_14 [1] : vector<8x32xf32> to vector<8xf32>
    %34 = vector.shape_cast %33 : vector<8xf32> to vector<8x1xf32>
    %cst_15 = arith.constant 3.200000e+01 : f32
    %35 = vector.broadcast %cst_15 : f32 to vector<8x1xf32>
    %36 = arith.divf %34, %35 : vector<8x1xf32>
    %37 = vector.broadcast %36 : vector<8x1xf32> to vector<8x32xf32>
    %38 = arith.subf %4, %37 : vector<8x32xf32>
    %39 = arith.mulf %38, %38 : vector<8x32xf32>
    %cst_16 = arith.constant dense<0.000000e+00> : vector<8xf32>
    %40 = vector.multi_reduction <add>, %39, %cst_16 [1] : vector<8x32xf32> to vector<8xf32>
    %41 = vector.shape_cast %40 : vector<8xf32> to vector<8x1xf32>
    %cst_17 = arith.constant 3.200000e+01 : f32
    %42 = vector.broadcast %cst_17 : f32 to vector<8x1xf32>
    %43 = arith.divf %41, %42 : vector<8x1xf32>
    %cst_18 = arith.constant 9.99999974E-6 : f32
    %44 = vector.broadcast %cst_18 : f32 to vector<8x1xf32>
    %45 = arith.addf %43, %44 : vector<8x1xf32>
    %46 = math.rsqrt %45 : vector<8x1xf32>
    %47 = vector.broadcast %46 : vector<8x1xf32> to vector<8x32xf32>
    %48 = arith.mulf %38, %47 : vector<8x32xf32>
    %49 = vector.broadcast %31 : vector<1x32xf32> to vector<8x32xf32>
    %50 = arith.mulf %48, %49 : vector<8x32xf32>
    %51 = vector.broadcast %32 : vector<1x32xf32> to vector<8x32xf32>
    %52 = arith.addf %50, %51 : vector<8x32xf32>
    %53 = arith.truncf %52 : vector<8x32xf32> to vector<8x32xbf16>
    %c0_19 = arith.constant 0 : index
    %c0_20 = arith.constant 0 : index
    %c0_21 = arith.constant 0 : index
    %54 = vector.load %arg6[%c0_19, %c0_20, %c0_21] : memref<1x8x32xbf16, #tpu.memory_space<vmem>>, vector<1x8x32xbf16>
    %55 = vector.shape_cast %54 : vector<1x8x32xbf16> to vector<8x32xbf16>
    %56 = vector.shape_cast %53 : vector<8x32xbf16> to vector<1x8x32xbf16>
    tpu.vector_store %arg6[%c0_19, %c0_20, %c0_21], %56 {strides = array<i32>} : memref<1x8x32xbf16, #tpu.memory_space<vmem>>, vector<1x8x32xbf16>,
    return
  }
  func.func @transform_0(%arg0: i32, %arg1: i32) -> (i32, i32, i32) {
    %c0_i32 = arith.constant 0 : i32
    %c0_i32_0 = arith.constant 0 : i32
    return %arg0, %arg1, %c0_i32 : i32, i32, i32
  }
  func.func @transform_1(%arg0: i32, %arg1: i32) -> (i32, i32, i32) {
    %c0_i32 = arith.constant 0 : i32
    %c0_i32_0 = arith.constant 0 : i32
    return %arg0, %arg1, %c0_i32 : i32, i32, i32
  }
  func.func @transform_2(%arg0: i32, %arg1: i32) -> (i32, i32) {
    %c0_i32 = arith.constant 0 : i32
    %c0_i32_0 = arith.constant 0 : i32
    %c0_i32_1 = arith.constant 0 : i32
    return %c0_i32, %c0_i32_0 : i32, i32
  }
  func.func @transform_3(%arg0: i32, %arg1: i32) -> (i32, i32, i32) {
    %c0_i32 = arith.constant 0 : i32
    %c0_i32_0 = arith.constant 0 : i32
    return %arg0, %arg1, %c0_i32 : i32, i32, i32
  }
  func.func @transform_4(%arg0: i32, %arg1: i32) -> (i32, i32, i32) {
    %c0_i32 = arith.constant 0 : i32
    %c0_i32_0 = arith.constant 0 : i32
    return %arg0, %arg1, %c0_i32 : i32, i32, i32
  }
}

</mosaic_0001>

<llo_original>
// kernel: tpu_custom_call.1
$region0: #{tpu_custom_call.1}
  #allocation0 [shape = 'u32[]', space=smem, size = 0x4, offset = 0x4, fixed_abs, tag = 'smem constant byte address 0x4 - core index']
  #allocation1 [shape = 'u32[144,128]{1,0:T(1,128)}', space=vmem, size = 0x12000, scoped, tag = 'internal scratch']
  %s0 = inlined_call_operand.hbm [shape: f32[2,8,32], index: 0, kind: input, shape index: {}]
  %s1 = inlined_call_operand.hbm [shape: f32[2,8,32], index: 1, kind: input, shape index: {}]
  %s2 = inlined_call_operand.hbm [shape: f32[8,32], index: 2, kind: input, shape index: {}]
  %s3 = inlined_call_operand.hbm [shape: bf16[2,8,32], index: 3, kind: output, shape index: {0}]
  %s4 = inlined_call_operand.hbm [shape: bf16[2,8,32], index: 4, kind: output, shape index: {1}]
  %5 = xla_tuple %s3, %s4
  %s6 = sld [smem:[#allocation0]]
  $region65: #{tpu_custom_call.1} parent=0
    _
  %s8 = ssub.s32 1, %s6
  %s9 = scalar_select 0, %s8, %s6
  $region1: #{tpu_custom_call.1} parent=0
    #allocation2 [shape = 'u8[8192]{0}', space=vmem, size = 0x2000, scoped, tag = 'input window, operand 0']
    #allocation3 [shape = 's32[2]{0}', space=sflag, size = 0x8, scoped, tag = 'scoped memory for tpu_custom_call.1']
    #allocation4 [shape = 's32[2]{0}', space=sflag, size = 0x8, scoped, tag = 'scoped memory for tpu_custom_call.1']
    #allocation5 [shape = 'u8[8192]{0}', space=vmem, size = 0x2000, scoped, tag = 'input window, operand 1']
    #allocation6 [shape = 's32[2]{0}', space=sflag, size = 0x8, scoped, tag = 'scoped memory for tpu_custom_call.1']
    #allocation7 [shape = 'u8[4096]{0}', space=vmem, size = 0x1000, scoped, tag = 'input window, operand 2, single buffered']
    #allocation8 [shape = 'u8[4096]{0}', space=vmem, size = 0x1000, scoped, tag = 'output window, operand 0']
    #allocation9 [shape = 'u8[4096]{0}', space=vmem, size = 0x1000, scoped, tag = 'output window, operand 1']
    #allocation10 [shape = 's32[2]{0}', space=sflag, size = 0x8, scoped, tag = 'scoped memory for tpu_custom_call.1']
    %10 = vsyncpa [#allocation3], 0
    %s11 = scalar_lea.sflag [#allocation3], 1
    %12 = vsyncpa %s11, 0
    %13 = vsyncpa [#allocation6], 0
    %s14 = scalar_lea.sflag [#allocation6], 1
    %15 = vsyncpa %s14, 0
    %16 = vsyncpa [#allocation4], 0
    %s17 = scalar_lea.sflag [#allocation4], 1
    %18 = vsyncpa %s17, 0
    %19 = vsyncpa [#allocation10], 0
    %s20 = scalar_lea.sflag [#allocation10], 1
    %21 = vsyncpa %s20, 0
    loop: start=0, step=1, limit=4
    $region2: #{tpu_custom_call.1} parent=1 // loop_pre_header
      _
    $region3: #{tpu_custom_call.1} parent=1 // loop_header
      %s23 = sphi 0, %s27
      %p24 = scmp.ge.s32.totalorder %s23, 4
      %s30 = sphi 0, %s42
      %s31 = sphi 0, %s38
      %s32 = sphi 0, %s30
      %s33 = sphi 0, %s31
      %s34 = sphi 0, %s32
      %s35 = sphi 0, %s33
      %s47 = sphi 0, %s49
      %s50 = sphi 0, %s47
      %s51 = sphi 0, %s50
      %s67 = sphi 0, %s51
      %s75 = sphi 0, %s77
      %s78 = sphi 0, %s75
      %s79 = sphi 0, %s78
      %s95 = sphi 0, %s79
      %s99 = sphi 0, %s99
      %s101 = sphi 0, %s99
      %s102 = sphi 0, %s101
      %s116 = sphi 0, %s102
      %s124 = sphi 0, %s126
      %s127 = sphi 0, %s124
      %s128 = sphi 0, %s127
      %s144 = sphi 0, %s128
      %s152 = sphi 0, %s154
      %s155 = sphi 0, %s152
      %s156 = sphi 0, %s155
      %s172 = sphi 0, %s156
    $region4: #{tpu_custom_call.1} parent=1 // loop_header_branch
      %26 = sbr.rel (%p24) target = $region8
    $region5: #{tpu_custom_call.1} parent=1 // loop_body
      %s28 = ssub.s32 %s23, 1
      %s29 = ssub.s32 %s23, 2
      %s36 = sadd.s32 1, %s31
      %p37 = scmp.ge.s32.totalorder %s36, 1
      %s38 = scalar_select %p37, 0, %s36
      %s39 = sadd.s32 1, %s30
      %s40 = scalar_select %p37, %s39, %s30
      %p41 = scmp.ge.s32.totalorder %s40, 2
      %s42 = scalar_select %p41, 0, %s40
      %s43 = ssub.s32 %s30, %s42
      %s44 = ssub.s32 %s31, %s38
      %s45 = sor.u32 %s43, %s44
      %p46 = scmp.eq.s32.totalorder %s45, 0
      %s48 = sadd.s32 %s47, 1
      %s49 = scalar_select %p46, %s47, %s48
      %p52 = pneg %p46
      %p53 = scmp.eq.s32.totalorder %s23, 1
      %p54 = por %p52, %p53
      %p55 = scmp.ne.s32.totalorder %s47, %s50
      %p56 = scmp.eq.s32.totalorder %s23, 0
      %p57 = por %p55, %p56
      %p58 = scmp.ne.s32.totalorder %s47, %s50
      %p59 = scmp.eq.s32.totalorder %s28, 1
      %p60 = por %p58, %p59
      %p61 = scmp.ne.s32.totalorder %s50, %s51
      %p62 = scmp.eq.s32.totalorder %s28, 0
      %p63 = por %p61, %p62
      %p64 = scmp.ne.s32.totalorder %s50, %s51
      %p65 = scmp.eq.s32.totalorder %s29, 1
      %p66 = por %p64, %p65
      %p68 = scmp.ne.s32.totalorder %s51, %s67
      %p69 = scmp.eq.s32.totalorder %s29, 0
      %p70 = por %p68, %p69
      %s71 = ssub.s32 %s30, %s42
      %s72 = ssub.s32 %s31, %s38
      %s73 = sor.u32 %s71, %s72
      %p74 = scmp.eq.s32.totalorder %s73, 0
      %s76 = sadd.s32 %s75, 1
      %s77 = scalar_select %p74, %s75, %s76
      %p80 = pneg %p74
      %p81 = scmp.eq.s32.totalorder %s23, 1
      %p82 = por %p80, %p81
      %p83 = scmp.ne.s32.totalorder %s75, %s78
      %p84 = scmp.eq.s32.totalorder %s23, 0
      %p85 = por %p83, %p84
      %p86 = scmp.ne.s32.totalorder %s75, %s78
      %p87 = scmp.eq.s32.totalorder %s28, 1
      %p88 = por %p86, %p87
      %p89 = scmp.ne.s32.totalorder %s78, %s79
      %p90 = scmp.eq.s32.totalorder %s28, 0
      %p91 = por %p89, %p90
      %p92 = scmp.ne.s32.totalorder %s78, %s79
      %p93 = scmp.eq.s32.totalorder %s29, 1
      %p94 = por %p92, %p93
      %p96 = scmp.ne.s32.totalorder %s79, %s95
      %p97 = scmp.eq.s32.totalorder %s29, 0
      %p98 = por %p96, %p97
      %s100 = sadd.s32 %s99, 1
      %p103 = scmp.eq.s32.totalorder %s23, 1
      %p104 = scmp.ne.s32.totalorder %s99, %s101
      %p105 = scmp.eq.s32.totalorder %s23, 0
      %p106 = por %p104, %p105
      %p107 = scmp.ne.s32.totalorder %s99, %s101
      %p108 = scmp.eq.s32.totalorder %s28, 1
      %p109 = por %p107, %p108
      %p110 = scmp.ne.s32.totalorder %s101, %s102
      %p111 = scmp.eq.s32.totalorder %s28, 0
      %p112 = por %p110, %p111
      %p113 = scmp.ne.s32.totalorder %s101, %s102
      %p114 = scmp.eq.s32.totalorder %s29, 1
      %p115 = por %p113, %p114
      %p117 = scmp.ne.s32.totalorder %s102, %s116
      %p118 = scmp.eq.s32.totalorder %s29, 0
      %p119 = por %p117, %p118
      %s120 = ssub.s32 %s30, %s42
      %s121 = ssub.s32 %s31, %s38
      %s122 = sor.u32 %s120, %s121
      %p123 = scmp.eq.s32.totalorder %s122, 0
      %s125 = sadd.s32 %s124, 1
      %s126 = scalar_select %p123, %s124, %s125
      %p129 = pneg %p123
      %p130 = scmp.eq.s32.totalorder %s23, 1
      %p131 = por %p129, %p130
      %p132 = scmp.ne.s32.totalorder %s124, %s127
      %p133 = scmp.eq.s32.totalorder %s23, 0
      %p134 = por %p132, %p133
      %p135 = scmp.ne.s32.totalorder %s124, %s127
      %p136 = scmp.eq.s32.totalorder %s28, 1
      %p137 = por %p135, %p136
      %p138 = scmp.ne.s32.totalorder %s127, %s128
      %p139 = scmp.eq.s32.totalorder %s28, 0
      %p140 = por %p138, %p139
      %p141 = scmp.ne.s32.totalorder %s127, %s128
      %p142 = scmp.eq.s32.totalorder %s29, 1
      %p143 = por %p141, %p142
      %p145 = scmp.ne.s32.totalorder %s128, %s144
      %p146 = scmp.eq.s32.totalorder %s29, 0
      %p147 = por %p145, %p146
      %s148 = ssub.s32 %s30, %s42
      %s149 = ssub.s32 %s31, %s38
      %s150 = sor.u32 %s148, %s149
      %p151 = scmp.eq.s32.totalorder %s150, 0
      %s153 = sadd.s32 %s152, 1
      %s154 = scalar_select %p151, %s152, %s153
      %p157 = pneg %p151
      %p158 = scmp.eq.s32.totalorder %s23, 1
      %p159 = por %p157, %p158
      %p160 = scmp.ne.s32.totalorder %s152, %s155
      %p161 = scmp.eq.s32.totalorder %s23, 0
      %p162 = por %p160, %p161
      %p163 = scmp.ne.s32.totalorder %s152, %s155
      %p164 = scmp.eq.s32.totalorder %s28, 1
      %p165 = por %p163, %p164
      %p166 = scmp.ne.s32.totalorder %s155, %s156
      %p167 = scmp.eq.s32.totalorder %s28, 0
      %p168 = por %p166, %p167
      %p169 = scmp.ne.s32.totalorder %s155, %s156
      %p170 = scmp.eq.s32.totalorder %s29, 1
      %p171 = por %p169, %p170
      %p173 = scmp.ne.s32.totalorder %s156, %s172
      %p174 = scmp.eq.s32.totalorder %s29, 0
      %p175 = por %p173, %p174
      %p176 = scmp.le.s32.totalorder 1, %s23
      %p177 = scmp.lt.s32.totalorder %s23, 3
      %p178 = pnand %p176, %p177
      %p179 = pneg %p178
      // Predicated region
      $region9: #{tpu_custom_call.1} parent=5 // pred_check
        _
      $region10: #{tpu_custom_call.1} parent=5 // pred_check_branch
        %181 = sbr.rel (%p178) target = $region12
      $region11: #{tpu_custom_call.1} parent=5 // pred_region
        %s182 = ssub.s32 %s23, 1
        // Predicated region
        $region13: #{tpu_custom_call.1} parent=11 // pred_check
          %p183 = pneg %p112
        $region14: #{tpu_custom_call.1} parent=11 // pred_check_branch
          %185 = sbr.rel (%p183) target = $region16
        $region15: #{tpu_custom_call.1} parent=11 // pred_region
          %s187 = ssub.s32 128, 128
          %188 = vsyncadd [#allocation6], %s187
          %s190 = sshll.u32 [#allocation7], 4
          %s191 = int_to_ptr.vmem [resolvable:$true] %s190
          %193 = dma.hbm_to_vmem [thread:$0]  %s2, 128, %s191, [#allocation6]
        $region16: #{tpu_custom_call.1} parent=11 // pred_fallthru
          _
      $region12: #{tpu_custom_call.1} parent=5 // pred_fallthru
        _
      %p194 = scmp.lt.s32.totalorder %s23, 2
      // Predicated region
      $region17: #{tpu_custom_call.1} parent=5 // pred_check
        %p195 = pneg %p194
      $region18: #{tpu_custom_call.1} parent=5 // pred_check_branch
        %197 = sbr.rel (%p195) target = $region20
      $region19: #{tpu_custom_call.1} parent=5 // pred_region
        // Predicated region
        $region21: #{tpu_custom_call.1} parent=19 // pred_check
          %p198 = pneg %p57
        $region22: #{tpu_custom_call.1} parent=19 // pred_check_branch
          %200 = sbr.rel (%p198) target = $region24
        $region23: #{tpu_custom_call.1} parent=19 // pred_region
          %s201 = sand.u32 %s47, 1
          %s202 = scalar_lea.sflag [#allocation3], %s201
          %s203 = sand.u32 %s47, 1
          %s204 = smul.addr %s203, 8
          %s205 = scalar_lea.vmem [#allocation2], %s204
          %s207 = ssub.s32 128, 128
          %208 = vsyncadd %s202, %s207
          %s209 = sadd.s32 %s31, %s30
          %s210 = smul.addr %s209, 128
          %s211 = scalar_lea.hbm %s0, %s210
          %s213 = sshll.u32 %s205, 4
          %s214 = int_to_ptr.vmem [resolvable:$true] %s213
          %216 = dma.hbm_to_vmem [thread:$0]  %s211, 128, %s214, %s202
        $region24: #{tpu_custom_call.1} parent=19 // pred_fallthru
          _
        // Predicated region
        $region25: #{tpu_custom_call.1} parent=19 // pred_check
          %p217 = pneg %p85
        $region26: #{tpu_custom_call.1} parent=19 // pred_check_branch
          %219 = sbr.rel (%p217) target = $region28
        $region27: #{tpu_custom_call.1} parent=19 // pred_region
          %s220 = sand.u32 %s23, 1
          %s221 = scalar_lea.sflag [#allocation6], %s220
          %s222 = sand.u32 %s75, 1
          %s223 = smul.addr %s222, 8
          %s224 = scalar_lea.vmem [#allocation5], %s223
          %s226 = ssub.s32 128, 128
          %227 = vsyncadd %s221, %s226
          %s228 = sadd.s32 %s31, %s30
          %s229 = smul.addr %s228, 128
          %s230 = scalar_lea.hbm %s1, %s229
          %s232 = sshll.u32 %s224, 4
          %s233 = int_to_ptr.vmem [resolvable:$true] %s232
          %235 = dma.hbm_to_vmem [thread:$0]  %s230, 128, %s233, %s221
        $region28: #{tpu_custom_call.1} parent=19 // pred_fallthru
          _
      $region20: #{tpu_custom_call.1} parent=5 // pred_fallthru
        _
      %p236 = scmp.le.s32.totalorder 1, %s23
      %p237 = scmp.lt.s32.totalorder %s23, 3
      %p238 = pnand %p236, %p237
      %p239 = pneg %p238
      // Predicated region
      $region29: #{tpu_custom_call.1} parent=5 // pred_check
        _
      $region30: #{tpu_custom_call.1} parent=5 // pred_check_branch
        %241 = sbr.rel (%p238) target = $region32
      $region31: #{tpu_custom_call.1} parent=5 // pred_region
        %s242 = ssub.s32 %s23, 1
        %s243 = sand.u32 %s50, 1
        %s244 = scalar_lea.sflag [#allocation3], %s243
        %s245 = sand.u32 %s50, 1
        %s246 = smul.addr %s245, 8
        %s247 = scalar_lea.vmem [#allocation2], %s246
        // Predicated region
        $region33: #{tpu_custom_call.1} parent=31 // pred_check
          %p248 = pneg %p63
        $region34: #{tpu_custom_call.1} parent=31 // pred_check_branch
          %250 = sbr.rel (%p248) target = $region36
        $region35: #{tpu_custom_call.1} parent=31 // pred_region
          %251 = dma.done %s244, 128
        $region36: #{tpu_custom_call.1} parent=31 // pred_fallthru
          _
        %s252 = sand.u32 %s28, 1
        %s253 = scalar_lea.sflag [#allocation6], %s252
        %s254 = sand.u32 %s78, 1
        %s255 = smul.addr %s254, 8
        %s256 = scalar_lea.vmem [#allocation5], %s255
        // Predicated region
        $region37: #{tpu_custom_call.1} parent=31 // pred_check
          %p257 = pneg %p91
        $region38: #{tpu_custom_call.1} parent=31 // pred_check_branch
          %259 = sbr.rel (%p257) target = $region40
        $region39: #{tpu_custom_call.1} parent=31 // pred_region
          %260 = dma.done %s253, 128
        $region40: #{tpu_custom_call.1} parent=31 // pred_fallthru
          _
        // Predicated region
        $region41: #{tpu_custom_call.1} parent=31 // pred_check
          %p261 = pneg %p112
        $region42: #{tpu_custom_call.1} parent=31 // pred_check_branch
          %263 = sbr.rel (%p261) target = $region44
        $region43: #{tpu_custom_call.1} parent=31 // pred_region
          %264 = dma.done [#allocation6], 128
        $region44: #{tpu_custom_call.1} parent=31 // pred_fallthru
          _
        %s265 = sand.u32 %s50, 1
        %s266 = scalar_lea.sflag [#allocation3], %s265
        %s267 = sand.u32 %s50, 1
        %s268 = smul.addr %s267, 8
        %s269 = scalar_lea.vmem [#allocation2], %s268
        %p270 = pneg %p63
        %p271 = pneg %p60
        %s272 = sand.u32 %s28, 1
        %s273 = scalar_lea.sflag [#allocation6], %s272
        %s274 = sand.u32 %s78, 1
        %s275 = smul.addr %s274, 8
        %s276 = scalar_lea.vmem [#allocation5], %s275
        %p277 = pneg %p91
        %p278 = pneg %p88
        %p279 = pneg %p112
        %p280 = pneg %p109
        %p281 = pneg %p140
        %p282 = pneg %p137
        %s283 = sand.u32 %s127, 1
        %s284 = scalar_lea.sflag [#allocation4], %s283
        %s285 = sand.u32 %s127, 1
        %s286 = smul.addr %s285, 4
        %s287 = scalar_lea.vmem [#allocation8], %s286
        %p288 = pneg %p168
        %p289 = pneg %p165
        %s290 = sand.u32 %s155, 1
        %s291 = scalar_lea.sflag [#allocation10], %s290
        %s292 = sand.u32 %s155, 1
        %s293 = smul.addr %s292, 4
        %s294 = scalar_lea.vmem [#allocation9], %s293
        %v295 = vld [vmem:[#allocation7] sm:$0xff]
        %v296 = vld [vmem:[%s247] sm:$0xff]
        %v297 = vld [vmem:[%s256] sm:$0xff]
        %vm298 = vcmask 261120
        %v299 = vsel %vm298, %v296, 0.0
        %300 = vadd.xlane.f32.xlu0 %v299
        %v301 = vpop.xlane.xlu0 %300
        %v302 = vrcp.pop 32.0
        %v303 = vmul.f32 %v301, %v302
        %v304 = vsub.f32 %v296, %v303
        %v305 = vmul.f32 %v304, %v304
        %v306 = vsel %vm298, %v305, 0.0
        %307 = vadd.xlane.f32.xlu0 %v306
        %v308 = vpop.xlane.xlu0 %307
        %v309 = vmul.f32 %v308, %v302
        %v310 = vadd.f32 %v309, 1e-05
        %v311 = vrsqrt.pop %v310
        %v312 = vmul.f32 %v304, %v311
        %v313 = vlaneseq
        %v314 = vshrl.u32 %v313, 7
        %v315 = vsub.s32 2, %v314
        %v316 = vrot.slane %v295, %v315
        %v317 = vmul.f32 %v312, %v316
        %v318 = vlaneseq
        %v319 = vshrl.u32 %v318, 7
        %v320 = vsub.s32 3, %v319
        %v321 = vrot.slane %v295, %v320
        %v322 = vadd.f32 %v317, %v321
        %v323 = vpack.c.bf16 %v322, %v322
        %vm324 = vcmask 257024
        %325 = vst.msk [vmem:[%s287] sm:$0xf] %vm324, %v323
        %v326 = vsel %vm298, %v297, 0.0
        %327 = vadd.xlane.f32.xlu0 %v326
        %v328 = vpop.xlane.xlu0 %327
        %v329 = vmul.f32 %v328, %v302
        %v330 = vsub.f32 %v297, %v329
        %v331 = vmul.f32 %v330, %v330
        %v332 = vsel %vm298, %v331, 0.0
        %333 = vadd.xlane.f32.xlu0 %v332
        %v334 = vpop.xlane.xlu0 %333
        %v335 = vmul.f32 %v334, %v302
        %v336 = vadd.f32 %v335, 1e-05
        %v337 = vrsqrt.pop %v336
        %v338 = vmul.f32 %v330, %v337
        %v339 = vlaneseq
        %v340 = vshrl.u32 %v339, 7
        %v341 = vsub.s32 4, %v340
        %v342 = vrot.slane %v295, %v341
        %v343 = vmul.f32 %v338, %v342
        %v344 = vlaneseq
        %v345 = vshrl.u32 %v344, 7
        %v346 = vsub.s32 5, %v345
        %v347 = vrot.slane %v295, %v346
        %v348 = vadd.f32 %v343, %v347
        %v349 = vpack.c.bf16 %v348, %v348
        %350 = vst.msk [vmem:[%s294] sm:$0xf] %vm324, %v349
        %s351 = sand.u32 %s127, 1
        %s352 = scalar_lea.sflag [#allocation4], %s351
        %s353 = sand.u32 %s127, 1
        %s354 = smul.addr %s353, 4
        %s355 = scalar_lea.vmem [#allocation8], %s354
        %s356 = sand.u32 %s155, 1
        %s357 = scalar_lea.sflag [#allocation10], %s356
        %s358 = sand.u32 %s155, 1
        %s359 = smul.addr %s358, 4
        %s360 = scalar_lea.vmem [#allocation9], %s359
        // Predicated region
        $region45: #{tpu_custom_call.1} parent=31 // pred_check
          %p361 = pneg %p137
        $region46: #{tpu_custom_call.1} parent=31 // pred_check_branch
          %363 = sbr.rel (%p361) target = $region48
        $region47: #{tpu_custom_call.1} parent=31 // pred_region
          %s365 = ssub.s32 64, 64
          %366 = vsyncadd %s352, %s365
          %s367 = sadd.s32 %s33, %s32
          %s368 = smul.addr %s367, 64
          %s369 = scalar_lea.hbm %s3, %s368
          %s371 = sshll.u32 %s355, 4
          %s372 = int_to_ptr.vmem [resolvable:$true] %s371
          %374 = dma.vmem_to_hbm [thread:$0]  %s372, 64, %s369, %s352
        $region48: #{tpu_custom_call.1} parent=31 // pred_fallthru
          _
        // Predicated region
        $region49: #{tpu_custom_call.1} parent=31 // pred_check
          %p375 = pneg %p165
        $region50: #{tpu_custom_call.1} parent=31 // pred_check_branch
          %377 = sbr.rel (%p375) target = $region52
        $region51: #{tpu_custom_call.1} parent=31 // pred_region
          %s379 = ssub.s32 64, 64
          %380 = vsyncadd %s357, %s379
          %s381 = sadd.s32 %s33, %s32
          %s382 = smul.addr %s381, 64
          %s383 = scalar_lea.hbm %s4, %s382
          %s385 = sshll.u32 %s360, 4
          %s386 = int_to_ptr.vmem [resolvable:$true] %s385
          %388 = dma.vmem_to_hbm [thread:$0]  %s386, 64, %s383, %s357
        $region52: #{tpu_custom_call.1} parent=31 // pred_fallthru
          _
      $region32: #{tpu_custom_call.1} parent=5 // pred_fallthru
        _
      %p389 = scmp.le.s32.totalorder 2, %s23
      // Predicated region
      $region53: #{tpu_custom_call.1} parent=5 // pred_check
        %p390 = pneg %p389
      $region54: #{tpu_custom_call.1} parent=5 // pred_check_branch
        %392 = sbr.rel (%p390) target = $region56
      $region55: #{tpu_custom_call.1} parent=5 // pred_region
        %s393 = ssub.s32 %s23, 2
        // Predicated region
        $region57: #{tpu_custom_call.1} parent=55 // pred_check
          %p394 = pneg %p143
        $region58: #{tpu_custom_call.1} parent=55 // pred_check_branch
          %396 = sbr.rel (%p394) target = $region60
        $region59: #{tpu_custom_call.1} parent=55 // pred_region
          %s397 = sand.u32 %s128, 1
          %s398 = scalar_lea.sflag [#allocation4], %s397
          %s399 = sand.u32 %s128, 1
          %s400 = smul.addr %s399, 4
          %s401 = scalar_lea.vmem [#allocation8], %s400
          %402 = dma.done %s398, 64
        $region60: #{tpu_custom_call.1} parent=55 // pred_fallthru
          _
        // Predicated region
        $region61: #{tpu_custom_call.1} parent=55 // pred_check
          %p403 = pneg %p171
        $region62: #{tpu_custom_call.1} parent=55 // pred_check_branch
          %405 = sbr.rel (%p403) target = $region64
        $region63: #{tpu_custom_call.1} parent=55 // pred_region
          %s406 = sand.u32 %s156, 1
          %s407 = scalar_lea.sflag [#allocation10], %s406
          %s408 = sand.u32 %s156, 1
          %s409 = smul.addr %s408, 4
          %s410 = scalar_lea.vmem [#allocation9], %s409
          %411 = dma.done %s407, 64
        $region64: #{tpu_custom_call.1} parent=55 // pred_fallthru
          _
      $region56: #{tpu_custom_call.1} parent=5 // pred_fallthru
        _
    $region6: #{tpu_custom_call.1} parent=1 // loop_footer
      %s27 = sadd.s32 1, %s23
    $region7: #{tpu_custom_call.1} parent=1 // loop_footer_branch
      %22 = sbr.rel target = $region3
    $region8: #{tpu_custom_call.1} parent=1 // loop_exit
      _
    %412 = vsyncpa [#allocation3], 1
    %s413 = scalar_lea.sflag [#allocation3], 1
    %414 = vsyncpa %s413, 1
    %415 = vsyncpa [#allocation6], 1
    %s416 = scalar_lea.sflag [#allocation6], 1
    %417 = vsyncpa %s416, 1
    %418 = vsyncpa [#allocation4], 1
    %s419 = scalar_lea.sflag [#allocation4], 1
    %420 = vsyncpa %s419, 1
    %421 = vsyncpa [#allocation10], 1
    %s422 = scalar_lea.sflag [#allocation10], 1
    %423 = vsyncpa %s422, 1

</llo_original>
